<compile_context>
chip_gen: v7x
topology: tpu7x:2x2x1
jax: 0.10.0
libtpu: 0.0.40
codegen_flags: <defaults>
</compile_context>

<pallas_src>
import numpy as np
import jax
import jax.numpy as jnp
from jax import lax
from jax.experimental import pallas as pl
from jax.experimental.pallas import tpu as pltpu


def _round_up(x, m):
    return (x + m - 1) // m * m


def _upconv_kernel(lhs_ref, bw_ref, y_ref, sum_ref, sq_ref):
    """One grid step: (block_m, Kpad) @ (Kpad, block_lw) on the MXU.

    Stores the lane-dense conv tile once (single wide unmasked vst) plus its
    per-step channel sum / sum-of-squares partials for the BN batch stats.
    """
    y = jnp.dot(lhs_ref[...], bw_ref[...], preferred_element_type=jnp.float32)
    y_ref[...] = y
    sum_ref[...] = jnp.sum(y, axis=0, keepdims=True)
    sq_ref[...] = jnp.sum(y * y, axis=0, keepdims=True)


def up_conv_forward(x_nchw, conv_w, conv_b, bn_gamma, bn_beta, eps=1e-5,
                    compute_dtype=jnp.bfloat16):
    """Forward matching PyTorch `up_conv` (module in default train() mode).

    x_nchw : (N, Cin, H, W) f32;  conv_w : (Cout, Cin, KH, KW) (OIHW)
    conv_b : (Cout,) (unused: cancels under train-mode BN)
    bn_gamma / bn_beta : (Cout,)
    returns (N, Cout, 2H, 2W) f32
    """
    del conv_b  # conv bias cancels exactly under train-mode BatchNorm.
    N, Cin, H, W = x_nchw.shape
    Cout, _, KH, KW = conv_w.shape
    assert KH % 2 == 1 and KW % 2 == 1, "odd kernel sizes only ('same' conv)"
    ph, pw = KH // 2, KW // 2

    # Sub-pixel decomposition tap ranges at original resolution.
    pad_t = -((0 - ph) // 2)
    pad_b = (KH - ph) // 2
    Th = pad_t + pad_b + 1
    pad_l = -((0 - pw) // 2)
    pad_r = (KW - pw) // 2
    Tw = pad_l + pad_r + 1
    Hp, Wp = H + Th - 1, W + Tw - 1
    H2, W2 = 2 * H, 2 * W
    WC = W * Cout
    LW = 4 * WC                      # lane width of one fused 4-phase row
    K = Th * Wp * Cin                # contraction length after folding the taps
    Kpad = _round_up(K, 128)         # dense, unmasked MXU feed on all gens

    # ---- M (row) tiling: stack batch rows into M, grid over row-bands. ----
    M_total = N * H
    if M_total >= 512:
        block_m = 256                # big bands amortize per-step overhead
    else:
        block_m = _round_up(M_total, 16)   # single step at tiny sizes
    M_pad = _round_up(M_total, block_m)
    grid_m = M_pad // block_m

    # ---- LW (output-column) tiling: 512-wide tiles feed all four v5e MXUs
    # and bound the weight-tile footprint for v7x's smaller VMEM.
    block_lw = 512 if (LW > 512 and LW % 512 == 0) else LW
    grid_lw = LW // block_lw
    # TODO(synk): for very large W/Cout, derive block_lw from a per-generation
    # VMEM budget (v7x: 64 MiB phys / 32 MiB scoped) and set vmem_limit_bytes;
    # and switch back to a stats+recompute two-pass when |y| >> |weights|.

    # ---- LHS: NHWC, zero-pad at ORIGINAL resolution, fold the Th row taps
    # into K so each output row needs exactly one matmul.
    x = jnp.transpose(x_nchw, (0, 2, 3, 1)).astype(jnp.float32)
    x = jnp.pad(x, ((0, 0), (pad_t, pad_b), (pad_l, pad_r), (0, 0)))
    x2d = x.reshape(N, Hp, Wp * Cin)
    lhs = jnp.concatenate([x2d[:, dh:dh + H, :] for dh in range(Th)], axis=-1)
    lhs = lhs.reshape(M_total, K)
    lhs = jnp.pad(lhs, ((0, M_pad - M_total), (0, Kpad - K)))
    lhs = lhs.astype(compute_dtype)

    # ---- banded phase weights B[(t,m,ci), (2a+b)*W*Cout + j*Cout + co] ----
    # Static scatter pattern (numpy) contracted once with the conv weights.
    P = np.zeros((KH, KW, Th, Wp, 4, W), np.float32)
    for a in range(2):
        for b in range(2):
            q = 2 * a + b
            for kh in range(KH):
                t = (a + kh - ph) // 2 + pad_t          # row-tap slot
                for kw in range(KW):
                    d = (b + kw - pw) // 2 + pad_l      # padded col offset
                    for j in range(W):
                        P[kh, kw, t, j + d, q, j] = 1.0
    w_hwio = jnp.transpose(conv_w, (2, 3, 1, 0)).astype(jnp.float32)
    bw = jnp.einsum('hwtmqj,hwio->tmiqjo', jnp.asarray(P), w_hwio)
    bw = bw.reshape(K, LW)
    bw = jnp.pad(bw, ((0, Kpad - K), (0, 0))).astype(compute_dtype)

    # ---- single fused pass: conv + per-step channel stats partials ----
    conv_call = pl.pallas_call(
        _upconv_kernel,
        out_shape=(jax.ShapeDtypeStruct((M_pad, LW), jnp.float32),
                   jax.ShapeDtypeStruct((grid_m, LW), jnp.float32),
                   jax.ShapeDtypeStruct((grid_m, LW), jnp.float32)),
        grid_spec=pltpu.PrefetchScalarGridSpec(
            num_scalar_prefetch=0,
            # Inner (fast) axis = M row-bands: the (larger) weight tile stays
            # resident in VMEM while the LHS streams; outer axis tiles LW.
            grid=(grid_lw, grid_m),
            in_specs=[pl.BlockSpec((block_m, Kpad), lambda l, g: (g, 0)),
                      pl.BlockSpec((Kpad, block_lw), lambda l, g: (0, l))],
            out_specs=[pl.BlockSpec((block_m, block_lw), lambda l, g: (g, l)),
                       pl.BlockSpec((1, block_lw), lambda l, g: (g, l)),
                       pl.BlockSpec((1, block_lw), lambda l, g: (g, l))]),
        compiler_params=pltpu.CompilerParams(
            dimension_semantics=("parallel", "parallel")),
    )
    y_full, s_part, sq_part = conv_call(lhs, bw)

    # ---- fold train-mode BN into per-channel scale/shift (f32) ----
    # (zero-padded M rows contribute 0 to both partials; count uses real dims)
    count = jnp.float32(N * H2 * W2)
    ch_sum = s_part.sum(axis=0).reshape(4, W, Cout).sum(axis=(0, 1))
    ch_sq = sq_part.sum(axis=0).reshape(4, W, Cout).sum(axis=(0, 1))
    mean = ch_sum / count
    var = jnp.maximum(ch_sq / count - mean * mean, 0.0)   # biased batch var
    inv_std = lax.rsqrt(var + eps)
    scale = bn_gamma.astype(jnp.float32) * inv_std
    shift = bn_beta.astype(jnp.float32) - mean * scale
    # TODO(synk): running_mean / running_var momentum updates (training-time
    # module side effect) are not reproduced; forward output is unaffected.

    # ---- BN affine + ReLU fused (by XLA) into the unavoidable phase
    # de-interleave / NCHW transpose: one more HBM round trip total.
    y = y_full[:M_total].reshape(N, H, 2, 2, W, Cout)      # (n, i, a, b, j, c)
    out = jnp.maximum(y * scale + shift, 0.0)
    out = out.transpose(0, 5, 1, 2, 4, 3).reshape(N, Cout, H2, W2)
    return out


def _reference(x_nchw, conv_w, conv_b, bn_gamma, bn_beta, eps=1e-5):
    """Pure-JAX/XLA reference mirroring the PyTorch forward (train-mode BN)."""
    x_up = jnp.repeat(jnp.repeat(x_nchw, 2, axis=2), 2, axis=3)
    KH, KW = conv_w.shape[2], conv_w.shape[3]
    y = lax.conv_general_dilated(
        x_up, conv_w, window_strides=(1, 1),
        padding=[(KH // 2, KH // 2), (KW // 2, KW // 2)],
        dimension_numbers=("NCHW", "OIHW", "NCHW"))
    y = y + conv_b[None, :, None, None]
    mean = jnp.mean(y, axis=(0, 2, 3), keepdims=True)
    var = jnp.mean((y - mean) ** 2, axis=(0, 2, 3), keepdims=True)
    y = (y - mean) * lax.rsqrt(var + eps)
    y = y * bn_gamma[None, :, None, None] + bn_beta[None, :, None, None]
    return jnp.maximum(y, 0.0)


if __name__ == "__main__":
    in_ch, out_ch, kernel = 4, 8, 3
    N, H, W = 2, 16, 16

    key = jax.random.PRNGKey(0)
    k_w, k_b, k_x = jax.random.split(key, 3)
    conv_w = jax.random.normal(k_w, (out_ch, in_ch, kernel, kernel), jnp.float32) * 0.1
    conv_b = jax.random.normal(k_b, (out_ch,), jnp.float32) * 0.1
    bn_gamma = jnp.ones((out_ch,), jnp.float32)
    bn_beta = jnp.zeros((out_ch,), jnp.float32)
    x = jax.random.normal(k_x, (N, in_ch, H, W), jnp.float32)

    ref = jax.block_until_ready(_reference(x, conv_w, conv_b, bn_gamma, bn_beta))

    # Exactness check of the restructured math with f32 MXU operands.
    out_f32 = jax.block_until_ready(
        up_conv_forward(x, conv_w, conv_b, bn_gamma, bn_beta,
                        compute_dtype=jnp.float32))
    assert out_f32.shape == (N, out_ch, 2 * H, 2 * W), out_f32.shape
    assert jnp.allclose(out_f32, ref, rtol=1e-3, atol=1e-3), \
        float(jnp.max(jnp.abs(out_f32 - ref)))

    # Default bf16 MXU path (per perf review). Tolerance covers bf16 input
    # quantization (~2^-9 relative on x / weights) propagated through the
    # unit-variance BN output.
    out = jax.block_until_ready(
        up_conv_forward(x, conv_w, conv_b, bn_gamma, bn_beta))
    assert out.shape == (N, out_ch, 2 * H, 2 * W), out.shape
    assert jnp.allclose(out, ref, rtol=2e-2, atol=2e-2), \
        float(jnp.max(jnp.abs(out - ref)))

    print("KERNEL_OK")
</pallas_src>

<mosaic_0001>
module attributes {stable_mosaic.version = 11 : i64} {
  func.func @_upconv_kernel(%arg0: i32, %arg1: i32, %arg2: memref<32x256xf32, #tpu.memory_space<vmem>>, %arg3: memref<256x512xf32, #tpu.memory_space<vmem>>, %arg4: memref<32x512xf32, #tpu.memory_space<vmem>>, %arg5: memref<1x512xf32, #tpu.memory_space<vmem>>, %arg6: memref<1x512xf32, #tpu.memory_space<vmem>>) attributes {dimension_semantics = [#tpu.dimension_semantics<parallel>, #tpu.dimension_semantics<parallel>], iteration_bounds = array<i64: 1, 1>, scalar_prefetch = 0 : i64, scratch_operands = 0 : i64, tpu.core_type = #tpu.core_type<tc>, window_params = [{transform_indices = @transform_0, window_bounds = array<i64: 32, 256>}, {transform_indices = @transform_1, window_bounds = array<i64: 256, 512>}, {transform_indices = @transform_2, window_bounds = array<i64: 32, 512>}, {transform_indices = @transform_3, window_bounds = array<i64: 1, 512>}, {transform_indices = @transform_4, window_bounds = array<i64: 1, 512>}]} {
    %c0 = arith.constant 0 : index
    %c0_0 = arith.constant 0 : index
    %0 = vector.load %arg2[%c0, %c0_0] : memref<32x256xf32, #tpu.memory_space<vmem>>, vector<32x256xf32>
    %c0_1 = arith.constant 0 : index
    %c0_2 = arith.constant 0 : index
    %1 = vector.load %arg3[%c0_1, %c0_2] : memref<256x512xf32, #tpu.memory_space<vmem>>, vector<256x512xf32>
    %cst = arith.constant dense<0.000000e+00> : vector<32x512xf32>
    %2 = tpu.matmul %0, %1, %cst {dimension_numbers = #tpu.dot_dimension_numbers<[1], [0], [0], [1], [0, 0, 1, 1], [], []>} : vector<32x256xf32>, vector<256x512xf32>, vector<32x512xf32> -> vector<32x512xf32>
    %c0_3 = arith.constant 0 : index
    %c0_4 = arith.constant 0 : index
    %3 = vector.load %arg4[%c0_3, %c0_4] : memref<32x512xf32, #tpu.memory_space<vmem>>, vector<32x512xf32>
    tpu.vector_store %arg4[%c0_3, %c0_4], %2 {strides = array<i32>} : memref<32x512xf32, #tpu.memory_space<vmem>>, vector<32x512xf32>,
    %cst_5 = arith.constant dense<0.000000e+00> : vector<512xf32>
    %4 = vector.multi_reduction <add>, %2, %cst_5 [0] : vector<32x512xf32> to vector<512xf32>
    %5 = vector.shape_cast %4 : vector<512xf32> to vector<1x512xf32>
    %c0_6 = arith.constant 0 : index
    %c0_7 = arith.constant 0 : index
    %6 = vector.load %arg5[%c0_6, %c0_7] : memref<1x512xf32, #tpu.memory_space<vmem>>, vector<1x512xf32>
    tpu.vector_store %arg5[%c0_6, %c0_7], %5 {strides = array<i32>} : memref<1x512xf32, #tpu.memory_space<vmem>>, vector<1x512xf32>,
    %7 = arith.mulf %2, %2 : vector<32x512xf32>
    %cst_8 = arith.constant dense<0.000000e+00> : vector<512xf32>
    %8 = vector.multi_reduction <add>, %7, %cst_8 [0] : vector<32x512xf32> to vector<512xf32>
    %9 = vector.shape_cast %8 : vector<512xf32> to vector<1x512xf32>
    %c0_9 = arith.constant 0 : index
    %c0_10 = arith.constant 0 : index
    %10 = vector.load %arg6[%c0_9, %c0_10] : memref<1x512xf32, #tpu.memory_space<vmem>>, vector<1x512xf32>
    tpu.vector_store %arg6[%c0_9, %c0_10], %9 {strides = array<i32>} : memref<1x512xf32, #tpu.memory_space<vmem>>, vector<1x512xf32>,
    return
  }
  func.func @transform_0(%arg0: i32, %arg1: i32) -> (i32, i32) {
    %c0_i32 = arith.constant 0 : i32
    %c0_i32_0 = arith.constant 0 : i32
    return %arg1, %c0_i32 : i32, i32
  }
  func.func @transform_1(%arg0: i32, %arg1: i32) -> (i32, i32) {
    %c0_i32 = arith.constant 0 : i32
    %c0_i32_0 = arith.constant 0 : i32
    return %c0_i32, %arg0 : i32, i32
  }
  func.func @transform_2(%arg0: i32, %arg1: i32) -> (i32, i32) {
    %c0_i32 = arith.constant 0 : i32
    return %arg1, %arg0 : i32, i32
  }
  func.func @transform_3(%arg0: i32, %arg1: i32) -> (i32, i32) {
    %c0_i32 = arith.constant 0 : i32
    return %arg1, %arg0 : i32, i32
  }
  func.func @transform_4(%arg0: i32, %arg1: i32) -> (i32, i32) {
    %c0_i32 = arith.constant 0 : i32
    return %arg1, %arg0 : i32, i32
  }
}

</mosaic_0001>

<llo_original>
// kernel: tpu_custom_call.1
$region0: #{tpu_custom_call.1}
  #allocation0 [shape = 'u32[]', space=smem, size = 0x4, offset = 0x4, fixed_abs, tag = 'smem constant byte address 0x4 - core index']
  #allocation1 [shape = 'u32[144,128]{1,0:T(1,128)}', space=vmem, size = 0x12000, scoped, tag = 'internal scratch']
  %s0 = inlined_call_operand.hbm [shape: f32[32,256], index: 0, kind: input, shape index: {}]
  %s1 = inlined_call_operand.hbm [shape: f32[256,512], index: 1, kind: input, shape index: {}]
  %s2 = inlined_call_operand.hbm [shape: f32[32,512], index: 2, kind: output, shape index: {0}]
  %s3 = inlined_call_operand.hbm [shape: f32[1,512], index: 3, kind: output, shape index: {1}]
  %s4 = inlined_call_operand.hbm [shape: f32[1,512], index: 4, kind: output, shape index: {2}]
  %5 = xla_tuple %s2, %s3, %s4
  %s6 = sld [smem:[#allocation0]]
  $region42: #{tpu_custom_call.1} parent=0
    _
  %s8 = ssub.s32 1, %s6
  %s9 = scalar_select 0, %s8, %s6
  $region1: #{tpu_custom_call.1} parent=0
    #allocation2 [shape = 'u8[32768]{0}', space=vmem, size = 0x8000, scoped, tag = 'input window, operand 0, single buffered']
    #allocation3 [shape = 's32[1]{0}', space=sflag, size = 0x4, scoped, tag = 'scoped memory for tpu_custom_call.1']
    #allocation4 [shape = 's32[1]{0}', space=sflag, size = 0x4, scoped, tag = 'scoped memory for tpu_custom_call.1']
    #allocation5 [shape = 'u8[524288]{0}', space=vmem, size = 0x80000, scoped, tag = 'input window, operand 1, single buffered']
    #allocation6 [shape = 's32[1]{0}', space=sflag, size = 0x4, scoped, tag = 'scoped memory for tpu_custom_call.1']
    #allocation7 [shape = 'u8[65536]{0}', space=vmem, size = 0x10000, scoped, tag = 'output window, operand 0, single buffered']
    #allocation8 [shape = 'u8[2048]{0}', space=vmem, size = 0x800, scoped, tag = 'output window, operand 1, single buffered']
    #allocation9 [shape = 's32[1]{0}', space=sflag, size = 0x4, scoped, tag = 'scoped memory for tpu_custom_call.1']
    #allocation10 [shape = 'u8[2048]{0}', space=vmem, size = 0x800, scoped, tag = 'output window, operand 2, single buffered']
    %10 = vsyncpa [#allocation3], 0
    %11 = vsyncpa [#allocation6], 0
    %12 = vsyncpa [#allocation4], 0
    %13 = vsyncpa [#allocation9], 0
    // Predicated region
    $region2: #{tpu_custom_call.1} parent=1 // pred_check
      _
    $region3: #{tpu_custom_call.1} parent=1 // pred_check_branch
      %15 = sbr.rel (0) target = $region5
    $region4: #{tpu_custom_call.1} parent=1 // pred_region
      %s17 = ssub.s32 1024, 1024
      %18 = vsyncadd [#allocation3], %s17
      %s19 = sshll.u32 [#allocation2], 4
      %s20 = int_to_ptr.vmem [resolvable:$true] %s19
      %25 = dma.hbm_to_vmem [thread:$0]  %s0, 1024, %s20, [#allocation3], 256, 256, 16
    $region5: #{tpu_custom_call.1} parent=1 // pred_fallthru
      _
    // Predicated region
    $region6: #{tpu_custom_call.1} parent=1 // pred_check
      _
    $region7: #{tpu_custom_call.1} parent=1 // pred_check_branch
      %27 = sbr.rel (0) target = $region9
    $region8: #{tpu_custom_call.1} parent=1 // pred_region
      %s29 = ssub.s32 16384, 16384
      %30 = vsyncadd [#allocation6], %s29
      %s31 = sshll.u32 [#allocation5], 4
      %s32 = int_to_ptr.vmem [resolvable:$true] %s31
      %37 = dma.hbm_to_vmem [thread:$0]  %s1, 16384, %s32, [#allocation6], 512, 512, 32
    $region9: #{tpu_custom_call.1} parent=1 // pred_fallthru
      _
    // Predicated region
    $region10: #{tpu_custom_call.1} parent=1 // pred_check
      _
    $region11: #{tpu_custom_call.1} parent=1 // pred_check_branch
      %39 = sbr.rel (0) target = $region13
    $region12: #{tpu_custom_call.1} parent=1 // pred_region
      %40 = dma.done [#allocation3], 1024
    $region13: #{tpu_custom_call.1} parent=1 // pred_fallthru
      _
    // Predicated region
    $region14: #{tpu_custom_call.1} parent=1 // pred_check
      _
    $region15: #{tpu_custom_call.1} parent=1 // pred_check_branch
      %42 = sbr.rel (0) target = $region17
    $region16: #{tpu_custom_call.1} parent=1 // pred_region
      %43 = dma.done [#allocation6], 16384
    $region17: #{tpu_custom_call.1} parent=1 // pred_fallthru
      _
    %v44 = vld [vmem:[#allocation2] sm:$0xff]
    %v45 = vld [vmem:[#allocation2 + $0x8] sm:$0xff]
    %v46 = vld [vmem:[#allocation2 + $0x10] sm:$0xff]
    %v47 = vld [vmem:[#allocation2 + $0x18] sm:$0xff]
    %v48 = vld [vmem:[#allocation2 + $0x20] sm:$0xff]
    %v49 = vld [vmem:[#allocation2 + $0x28] sm:$0xff]
    %v50 = vld [vmem:[#allocation2 + $0x30] sm:$0xff]
    %v51 = vld [vmem:[#allocation2 + $0x38] sm:$0xff]
    %v52 = vld [vmem:[#allocation5] sm:$0xff]
    %v53 = vld [vmem:[#allocation5 + $0x8] sm:$0xff]
    %v54 = vld [vmem:[#allocation5 + $0x10] sm:$0xff]
    %v55 = vld [vmem:[#allocation5 + $0x18] sm:$0xff]
    %v56 = vld [vmem:[#allocation5 + $0x20] sm:$0xff]
    %v57 = vld [vmem:[#allocation5 + $0x28] sm:$0xff]
    %v58 = vld [vmem:[#allocation5 + $0x30] sm:$0xff]
    %v59 = vld [vmem:[#allocation5 + $0x38] sm:$0xff]
    %v60 = vld [vmem:[#allocation5 + $0x40] sm:$0xff]
    %v61 = vld [vmem:[#allocation5 + $0x48] sm:$0xff]
    %v62 = vld [vmem:[#allocation5 + $0x50] sm:$0xff]
    %v63 = vld [vmem:[#allocation5 + $0x58] sm:$0xff]
    %v64 = vld [vmem:[#allocation5 + $0x60] sm:$0xff]
    %v65 = vld [vmem:[#allocation5 + $0x68] sm:$0xff]
    %v66 = vld [vmem:[#allocation5 + $0x70] sm:$0xff]
    %v67 = vld [vmem:[#allocation5 + $0x78] sm:$0xff]
    %v68 = vld [vmem:[#allocation5 + $0x80] sm:$0xff]
    %v69 = vld [vmem:[#allocation5 + $0x88] sm:$0xff]
    %v70 = vld [vmem:[#allocation5 + $0x90] sm:$0xff]
    %v71 = vld [vmem:[#allocation5 + $0x98] sm:$0xff]
    %v72 = vld [vmem:[#allocation5 + $0xa0] sm:$0xff]
    %v73 = vld [vmem:[#allocation5 + $0xa8] sm:$0xff]
    %v74 = vld [vmem:[#allocation5 + $0xb0] sm:$0xff]
    %v75 = vld [vmem:[#allocation5 + $0xb8] sm:$0xff]
    %v76 = vld [vmem:[#allocation5 + $0xc0] sm:$0xff]
    %v77 = vld [vmem:[#allocation5 + $0xc8] sm:$0xff]
    %v78 = vld [vmem:[#allocation5 + $0xd0] sm:$0xff]
    %v79 = vld [vmem:[#allocation5 + $0xd8] sm:$0xff]
    %v80 = vld [vmem:[#allocation5 + $0xe0] sm:$0xff]
    %v81 = vld [vmem:[#allocation5 + $0xe8] sm:$0xff]
    %v82 = vld [vmem:[#allocation5 + $0xf0] sm:$0xff]
    %v83 = vld [vmem:[#allocation5 + $0xf8] sm:$0xff]
    %v84 = vld [vmem:[#allocation5 + $0x100] sm:$0xff]
    %v85 = vld [vmem:[#allocation5 + $0x108] sm:$0xff]
    %v86 = vld [vmem:[#allocation5 + $0x110] sm:$0xff]
    %v87 = vld [vmem:[#allocation5 + $0x118] sm:$0xff]
    %v88 = vld [vmem:[#allocation5 + $0x120] sm:$0xff]
    %v89 = vld [vmem:[#allocation5 + $0x128] sm:$0xff]
    %v90 = vld [vmem:[#allocation5 + $0x130] sm:$0xff]
    %v91 = vld [vmem:[#allocation5 + $0x138] sm:$0xff]
    %v92 = vld [vmem:[#allocation5 + $0x140] sm:$0xff]
    %v93 = vld [vmem:[#allocation5 + $0x148] sm:$0xff]
    %v94 = vld [vmem:[#allocation5 + $0x150] sm:$0xff]
    %v95 = vld [vmem:[#allocation5 + $0x158] sm:$0xff]
    %v96 = vld [vmem:[#allocation5 + $0x160] sm:$0xff]
    %v97 = vld [vmem:[#allocation5 + $0x168] sm:$0xff]
    %v98 = vld [vmem:[#allocation5 + $0x170] sm:$0xff]
    %v99 = vld [vmem:[#allocation5 + $0x178] sm:$0xff]
    %v100 = vld [vmem:[#allocation5 + $0x180] sm:$0xff]
    %v101 = vld [vmem:[#allocation5 + $0x188] sm:$0xff]
    %v102 = vld [vmem:[#allocation5 + $0x190] sm:$0xff]
    %v103 = vld [vmem:[#allocation5 + $0x198] sm:$0xff]
    %v104 = vld [vmem:[#allocation5 + $0x1a0] sm:$0xff]
    %v105 = vld [vmem:[#allocation5 + $0x1a8] sm:$0xff]
    %v106 = vld [vmem:[#allocation5 + $0x1b0] sm:$0xff]
    %v107 = vld [vmem:[#allocation5 + $0x1b8] sm:$0xff]
    %v108 = vld [vmem:[#allocation5 + $0x1c0] sm:$0xff]
    %v109 = vld [vmem:[#allocation5 + $0x1c8] sm:$0xff]
    %v110 = vld [vmem:[#allocation5 + $0x1d0] sm:$0xff]
    %v111 = vld [vmem:[#allocation5 + $0x1d8] sm:$0xff]
    %v112 = vld [vmem:[#allocation5 + $0x1e0] sm:$0xff]
    %v113 = vld [vmem:[#allocation5 + $0x1e8] sm:$0xff]
    %v114 = vld [vmem:[#allocation5 + $0x1f0] sm:$0xff]
    %v115 = vld [vmem:[#allocation5 + $0x1f8] sm:$0xff]
    %v116 = vld [vmem:[#allocation5 + $0x200] sm:$0xff]
    %v117 = vld [vmem:[#allocation5 + $0x208] sm:$0xff]
    %v118 = vld [vmem:[#allocation5 + $0x210] sm:$0xff]
    %v119 = vld [vmem:[#allocation5 + $0x218] sm:$0xff]
    %v120 = vld [vmem:[#allocation5 + $0x220] sm:$0xff]
    %v121 = vld [vmem:[#allocation5 + $0x228] sm:$0xff]
    %v122 = vld [vmem:[#allocation5 + $0x230] sm:$0xff]
    %v123 = vld [vmem:[#allocation5 + $0x238] sm:$0xff]
    %v124 = vld [vmem:[#allocation5 + $0x240] sm:$0xff]
    %v125 = vld [vmem:[#allocation5 + $0x248] sm:$0xff]
    %v126 = vld [vmem:[#allocation5 + $0x250] sm:$0xff]
    %v127 = vld [vmem:[#allocation5 + $0x258] sm:$0xff]
    %v128 = vld [vmem:[#allocation5 + $0x260] sm:$0xff]
    %v129 = vld [vmem:[#allocation5 + $0x268] sm:$0xff]
    %v130 = vld [vmem:[#allocation5 + $0x270] sm:$0xff]
    %v131 = vld [vmem:[#allocation5 + $0x278] sm:$0xff]
    %v132 = vld [vmem:[#allocation5 + $0x280] sm:$0xff]
    %v133 = vld [vmem:[#allocation5 + $0x288] sm:$0xff]
    %v134 = vld [vmem:[#allocation5 + $0x290] sm:$0xff]
    %v135 = vld [vmem:[#allocation5 + $0x298] sm:$0xff]
    %v136 = vld [vmem:[#allocation5 + $0x2a0] sm:$0xff]
    %v137 = vld [vmem:[#allocation5 + $0x2a8] sm:$0xff]
    %v138 = vld [vmem:[#allocation5 + $0x2b0] sm:$0xff]
    %v139 = vld [vmem:[#allocation5 + $0x2b8] sm:$0xff]
    %v140 = vld [vmem:[#allocation5 + $0x2c0] sm:$0xff]
    %v141 = vld [vmem:[#allocation5 + $0x2c8] sm:$0xff]
    %v142 = vld [vmem:[#allocation5 + $0x2d0] sm:$0xff]
    %v143 = vld [vmem:[#allocation5 + $0x2d8] sm:$0xff]
    %v144 = vld [vmem:[#allocation5 + $0x2e0] sm:$0xff]
    %v145 = vld [vmem:[#allocation5 + $0x2e8] sm:$0xff]
    %v146 = vld [vmem:[#allocation5 + $0x2f0] sm:$0xff]
    %v147 = vld [vmem:[#allocation5 + $0x2f8] sm:$0xff]
    %v148 = vld [vmem:[#allocation5 + $0x300] sm:$0xff]
    %v149 = vld [vmem:[#allocation5 + $0x308] sm:$0xff]
    %v150 = vld [vmem:[#allocation5 + $0x310] sm:$0xff]
    %v151 = vld [vmem:[#allocation5 + $0x318] sm:$0xff]
    %v152 = vld [vmem:[#allocation5 + $0x320] sm:$0xff]
    %v153 = vld [vmem:[#allocation5 + $0x328] sm:$0xff]
    %v154 = vld [vmem:[#allocation5 + $0x330] sm:$0xff]
    %v155 = vld [vmem:[#allocation5 + $0x338] sm:$0xff]
    %v156 = vld [vmem:[#allocation5 + $0x340] sm:$0xff]
    %v157 = vld [vmem:[#allocation5 + $0x348] sm:$0xff]
    %v158 = vld [vmem:[#allocation5 + $0x350] sm:$0xff]
    %v159 = vld [vmem:[#allocation5 + $0x358] sm:$0xff]
    %v160 = vld [vmem:[#allocation5 + $0x360] sm:$0xff]
    %v161 = vld [vmem:[#allocation5 + $0x368] sm:$0xff]
    %v162 = vld [vmem:[#allocation5 + $0x370] sm:$0xff]
    %v163 = vld [vmem:[#allocation5 + $0x378] sm:$0xff]
    %v164 = vld [vmem:[#allocation5 + $0x380] sm:$0xff]
    %v165 = vld [vmem:[#allocation5 + $0x388] sm:$0xff]
    %v166 = vld [vmem:[#allocation5 + $0x390] sm:$0xff]
    %v167 = vld [vmem:[#allocation5 + $0x398] sm:$0xff]
    %v168 = vld [vmem:[#allocation5 + $0x3a0] sm:$0xff]
    %v169 = vld [vmem:[#allocation5 + $0x3a8] sm:$0xff]
    %v170 = vld [vmem:[#allocation5 + $0x3b0] sm:$0xff]
    %v171 = vld [vmem:[#allocation5 + $0x3b8] sm:$0xff]
    %v172 = vld [vmem:[#allocation5 + $0x3c0] sm:$0xff]
    %v173 = vld [vmem:[#allocation5 + $0x3c8] sm:$0xff]
    %v174 = vld [vmem:[#allocation5 + $0x3d0] sm:$0xff]
    %v175 = vld [vmem:[#allocation5 + $0x3d8] sm:$0xff]
    %v176 = vld [vmem:[#allocation5 + $0x3e0] sm:$0xff]
    %v177 = vld [vmem:[#allocation5 + $0x3e8] sm:$0xff]
    %v178 = vld [vmem:[#allocation5 + $0x3f0] sm:$0xff]
    %v179 = vld [vmem:[#allocation5 + $0x3f8] sm:$0xff]
    %180 = vmatprep.subr.mxu0 %v53
    %181 = vmatpush1.msra.mxu0 %v52
    %182 = vmatprep.subr.mxu0 %v57
    %183 = vmatpush1.msra.mxu0 %v56
    %184 = vmatprep.subr.mxu0 %v61
    %185 = vmatpush1.msra.mxu0 %v60
    %186 = vmatprep.subr.mxu0 %v65
    %187 = vmatpush1.msra.mxu0 %v64
    %188 = vmatprep.subr.mxu0 %v69
    %189 = vmatpush1.msra.mxu0 %v68
    %190 = vmatprep.subr.mxu0 %v73
    %191 = vmatpush1.msra.mxu0 %v72
    %192 = vmatprep.subr.mxu0 %v77
    %193 = vmatpush1.msra.mxu0 %v76
    %194 = vmatprep.subr.mxu0 %v81
    %195 = vmatpush1.msra.mxu0 %v80
    %196 = vmatprep.subr.mxu0 %v85
    %197 = vmatpush1.msra.mxu0 %v84
    %198 = vmatprep.subr.mxu0 %v89
    %199 = vmatpush1.msra.mxu0 %v88
    %200 = vmatprep.subr.mxu0 %v93
    %201 = vmatpush1.msra.mxu0 %v92
    %202 = vmatprep.subr.mxu0 %v97
    %203 = vmatpush1.msra.mxu0 %v96
    %204 = vmatprep.subr.mxu0 %v101
    %205 = vmatpush1.msra.mxu0 %v100
    %206 = vmatprep.subr.mxu0 %v105
    %207 = vmatpush1.msra.mxu0 %v104
    %208 = vmatprep.subr.mxu0 %v109
    %209 = vmatpush1.msra.mxu0 %v108
    %210 = vmatprep.subr.mxu0 %v113
    %211 = vmatpush1.msra.mxu0 %v112
    %212 = vmatprep.subr.mxu0 %v117
    %213 = vmatpush1.msra.mxu0 %v116
    %214 = vmatprep.subr.mxu0 %v121
    %215 = vmatpush1.msra.mxu0 %v120
    %216 = vmatprep.subr.mxu0 %v125
    %217 = vmatpush1.msra.mxu0 %v124
    %218 = vmatprep.subr.mxu0 %v129
    %219 = vmatpush1.msra.mxu0 %v128
    %220 = vmatprep.subr.mxu0 %v133
    %221 = vmatpush1.msra.mxu0 %v132
    %222 = vmatprep.subr.mxu0 %v137
    %223 = vmatpush1.msra.mxu0 %v136
    %224 = vmatprep.subr.mxu0 %v141
    %225 = vmatpush1.msra.mxu0 %v140
    %226 = vmatprep.subr.mxu0 %v145
    %227 = vmatpush1.msra.mxu0 %v144
    %228 = vmatprep.subr.mxu0 %v149
    %229 = vmatpush1.msra.mxu0 %v148
    %230 = vmatprep.subr.mxu0 %v153
    %231 = vmatpush1.msra.mxu0 %v152
    %232 = vmatprep.subr.mxu0 %v157
    %233 = vmatpush1.msra.mxu0 %v156
    %234 = vmatprep.subr.mxu0 %v161
    %235 = vmatpush1.msra.mxu0 %v160
    %236 = vmatprep.subr.mxu0 %v165
    %237 = vmatpush1.msra.mxu0 %v164
    %238 = vmatprep.subr.mxu0 %v169
    %239 = vmatpush1.msra.mxu0 %v168
    %240 = vmatprep.subr.mxu0 %v173
    %241 = vmatpush1.msra.mxu0 %v172
    %242 = vmatprep.subr.mxu0 %v177
    %243 = vmatpush1.msra.mxu0 %v176
    %244 = vmatprep.mubr.f32.mxu0 %v45
    %245 = vmatmul.mubr.f32.gmra.mrb[0].mxu0 %v44
    %v246 = vpop.f32.mrb[0].mxu0
    %v247 = vadd.f32 0.0, %v246
    %v248 = vpop.f32.mrb[0].mxu0
    %v249 = vadd.f32 0.0, %v248
    %250 = vmatprep.mubr.f32.mxu0 %v47
    %251 = vmatmul.mubr.f32.gmra.mrb[0].mxu0 %v46
    %v252 = vpop.f32.mrb[0].mxu0
    %v253 = vadd.f32 0.0, %v252
    %v254 = vpop.f32.mrb[0].mxu0
    %v255 = vadd.f32 0.0, %v254
    %256 = vmatprep.mubr.f32.mxu0 %v49
    %257 = vmatmul.mubr.f32.gmra.mrb[0].mxu0 %v48
    %v258 = vpop.f32.mrb[0].mxu0
    %v259 = vadd.f32 0.0, %v258
    %v260 = vpop.f32.mrb[0].mxu0
    %v261 = vadd.f32 0.0, %v260
    %262 = vmatprep.mubr.f32.mxu0 %v51
    %263 = vmatmul.mubr.f32.gmra.mrb[0].mxu0 %v50
    %v264 = vpop.f32.mrb[0].mxu0
    %v265 = vadd.f32 0.0, %v264
    %v266 = vpop.f32.mrb[0].mxu0
    %v267 = vadd.f32 0.0, %v266
    %268 = vdwg.mxu0
    %269 = vmatprep.subr.mxu0 %v55
    %270 = vmatpush1.msra.mxu0 %v54
    %271 = vmatprep.subr.mxu0 %v59
    %272 = vmatpush1.msra.mxu0 %v58
    %273 = vmatprep.subr.mxu0 %v63
    %274 = vmatpush1.msra.mxu0 %v62
    %275 = vmatprep.subr.mxu0 %v67
    %276 = vmatpush1.msra.mxu0 %v66
    %277 = vmatprep.subr.mxu0 %v71
    %278 = vmatpush1.msra.mxu0 %v70
    %279 = vmatprep.subr.mxu0 %v75
    %280 = vmatpush1.msra.mxu0 %v74
    %281 = vmatprep.subr.mxu0 %v79
    %282 = vmatpush1.msra.mxu0 %v78
    %283 = vmatprep.subr.mxu0 %v83
    %284 = vmatpush1.msra.mxu0 %v82
    %285 = vmatprep.subr.mxu0 %v87
    %286 = vmatpush1.msra.mxu0 %v86
    %287 = vmatprep.subr.mxu0 %v91
    %288 = vmatpush1.msra.mxu0 %v90
    %289 = vmatprep.subr.mxu0 %v95
    %290 = vmatpush1.msra.mxu0 %v94
    %291 = vmatprep.subr.mxu0 %v99
    %292 = vmatpush1.msra.mxu0 %v98
    %293 = vmatprep.subr.mxu0 %v103
    %294 = vmatpush1.msra.mxu0 %v102
    %295 = vmatprep.subr.mxu0 %v107
    %296 = vmatpush1.msra.mxu0 %v106
    %297 = vmatprep.subr.mxu0 %v111
    %298 = vmatpush1.msra.mxu0 %v110
    %299 = vmatprep.subr.mxu0 %v115
    %300 = vmatpush1.msra.mxu0 %v114
    %301 = vmatprep.subr.mxu0 %v119
    %302 = vmatpush1.msra.mxu0 %v118
    %303 = vmatprep.subr.mxu0 %v123
    %304 = vmatpush1.msra.mxu0 %v122
    %305 = vmatprep.subr.mxu0 %v127
    %306 = vmatpush1.msra.mxu0 %v126
    %307 = vmatprep.subr.mxu0 %v131
    %308 = vmatpush1.msra.mxu0 %v130
    %309 = vmatprep.subr.mxu0 %v135
    %310 = vmatpush1.msra.mxu0 %v134
    %311 = vmatprep.subr.mxu0 %v139
    %312 = vmatpush1.msra.mxu0 %v138
    %313 = vmatprep.subr.mxu0 %v143
    %314 = vmatpush1.msra.mxu0 %v142
    %315 = vmatprep.subr.mxu0 %v147
    %316 = vmatpush1.msra.mxu0 %v146
    %317 = vmatprep.subr.mxu0 %v151
    %318 = vmatpush1.msra.mxu0 %v150
    %319 = vmatprep.subr.mxu0 %v155
    %320 = vmatpush1.msra.mxu0 %v154
    %321 = vmatprep.subr.mxu0 %v159
    %322 = vmatpush1.msra.mxu0 %v158
    %323 = vmatprep.subr.mxu0 %v163
    %324 = vmatpush1.msra.mxu0 %v162
    %325 = vmatprep.subr.mxu0 %v167
    %326 = vmatpush1.msra.mxu0 %v166
    %327 = vmatprep.subr.mxu0 %v171
    %328 = vmatpush1.msra.mxu0 %v170
    %329 = vmatprep.subr.mxu0 %v175
    %330 = vmatpush1.msra.mxu0 %v174
    %331 = vmatprep.subr.mxu0 %v179
    %332 = vmatpush1.msra.mxu0 %v178
    %333 = vmatprep.mubr.f32.mxu0 %v45
    %334 = vmatmul.mubr.f32.gmra.mrb[0].mxu0 %v44
    %v335 = vpop.f32.mrb[0].mxu0
    %v336 = vadd.f32 0.0, %v335
    %v337 = vpop.f32.mrb[0].mxu0
    %v338 = vadd.f32 0.0, %v337
    %339 = vmatprep.mubr.f32.mxu0 %v47
    %340 = vmatmul.mubr.f32.gmra.mrb[0].mxu0 %v46
    %v341 = vpop.f32.mrb[0].mxu0
    %v342 = vadd.f32 0.0, %v341
    %v343 = vpop.f32.mrb[0].mxu0
    %v344 = vadd.f32 0.0, %v343
    %345 = vmatprep.mubr.f32.mxu0 %v49
    %346 = vmatmul.mubr.f32.gmra.mrb[0].mxu0 %v48
    %v347 = vpop.f32.mrb[0].mxu0
    %v348 = vadd.f32 0.0, %v347
    %v349 = vpop.f32.mrb[0].mxu0
    %v350 = vadd.f32 0.0, %v349
    %351 = vmatprep.mubr.f32.mxu0 %v51
    %352 = vmatmul.mubr.f32.gmra.mrb[0].mxu0 %v50
    %v353 = vpop.f32.mrb[0].mxu0
    %v354 = vadd.f32 0.0, %v353
    %v355 = vpop.f32.mrb[0].mxu0
    %v356 = vadd.f32 0.0, %v355
    %357 = vdwg.mxu0
    %358 = vst [vmem:[#allocation7] sm:$0xff] %v247
    %359 = vst [vmem:[#allocation7 + $0x8] sm:$0xff] %v249
    %360 = vst [vmem:[#allocation7 + $0x10] sm:$0xff] %v336
    %361 = vst [vmem:[#allocation7 + $0x18] sm:$0xff] %v338
    %362 = vst [vmem:[#allocation7 + $0x20] sm:$0xff] %v253
    %363 = vst [vmem:[#allocation7 + $0x28] sm:$0xff] %v255
    %364 = vst [vmem:[#allocation7 + $0x30] sm:$0xff] %v342
    %365 = vst [vmem:[#allocation7 + $0x38] sm:$0xff] %v344
    %366 = vst [vmem:[#allocation7 + $0x40] sm:$0xff] %v259
    %367 = vst [vmem:[#allocation7 + $0x48] sm:$0xff] %v261
    %368 = vst [vmem:[#allocation7 + $0x50] sm:$0xff] %v348
    %369 = vst [vmem:[#allocation7 + $0x58] sm:$0xff] %v350
    %370 = vst [vmem:[#allocation7 + $0x60] sm:$0xff] %v265
    %371 = vst [vmem:[#allocation7 + $0x68] sm:$0xff] %v267
    %372 = vst [vmem:[#allocation7 + $0x70] sm:$0xff] %v354
    %373 = vst [vmem:[#allocation7 + $0x78] sm:$0xff] %v356
    %v374 = vadd.f32 %v247, %v253
    %v375 = vadd.f32 %v374, %v259
    %v376 = vadd.f32 %v375, %v265
    %v377 = vrot.slane %v376, 4
    %v378 = vadd.f32 %v376, %v377
    %v379 = vrot.slane %v378, 2
    %v380 = vadd.f32 %v378, %v379
    %v381 = vrot.slane %v380, 1
    %v382 = vadd.f32 %v380, %v381
    %v383 = vadd.f32 %v249, %v255
    %v384 = vadd.f32 %v383, %v261
    %v385 = vadd.f32 %v384, %v267
    %v386 = vrot.slane %v385, 4
    %v387 = vadd.f32 %v385, %v386
    %v388 = vrot.slane %v387, 2
    %v389 = vadd.f32 %v387, %v388
    %v390 = vrot.slane %v389, 1
    %v391 = vadd.f32 %v389, %v390
    %v392 = vadd.f32 %v336, %v342
    %v393 = vadd.f32 %v392, %v348
    %v394 = vadd.f32 %v393, %v354
    %v395 = vrot.slane %v394, 4
    %v396 = vadd.f32 %v394, %v395
    %v397 = vrot.slane %v396, 2
    %v398 = vadd.f32 %v396, %v397
    %v399 = vrot.slane %v398, 1
    %v400 = vadd.f32 %v398, %v399
    %v401 = vadd.f32 %v338, %v344
    %v402 = vadd.f32 %v401, %v350
    %v403 = vadd.f32 %v402, %v356
    %v404 = vrot.slane %v403, 4
    %v405 = vadd.f32 %v403, %v404
    %v406 = vrot.slane %v405, 2
    %v407 = vadd.f32 %v405, %v406
    %v408 = vrot.slane %v407, 1
    %v409 = vadd.f32 %v407, %v408
    %v414 = vcombine.low %v382, %v391
    %v415 = vcombine.low %v400, %v409
    %v417 = vunpack.c.l.s4 1966171168
    %v418 = vunpack.c.0.s8 %v417
    %v419 = vlaneseq
    %v420 = vshrl.u32 %v419, 7
    %v421 = vsub.s32 %v418, %v420
    %v422 = vrot.slane %v414, %v421
    %v424 = vunpack.c.l.s4 1966171168
    %v425 = vunpack.c.0.s8 %v424
    %v426 = vlaneseq
    %v427 = vshrl.u32 %v426, 7
    %v428 = vsub.s32 %v425, %v427
    %v429 = vrot.slane %v415, %v428
    %v430 = vcombine.low %v422, %v429
    %v432 = vunpack.c.l.s4 1966171168
    %v433 = vunpack.c.0.s8 %v432
    %v434 = vlaneseq
    %v435 = vshrl.u32 %v434, 7
    %v436 = vsub.s32 %v433, %v435
    %v437 = vrot.slane %v430, %v436
    %v439 = vlaneseq
    %vm440 = vcmp.ge.s32.totalorder %v439, 0
    %vm441 = vcmp.lt.s32.totalorder %v439, 512
    %vm442 = vmand %vm440, %vm441
    %443 = vst.msk [vmem:[#allocation8] sm:$0xf] %vm442, %v437
    %v444 = vmul.f32 %v247, %v247
    %v445 = vmul.f32 %v249, %v249
    %v446 = vmul.f32 %v336, %v336
    %v447 = vmul.f32 %v338, %v338
    %v448 = vmul.f32 %v253, %v253
    %v449 = vmul.f32 %v255, %v255
    %v450 = vmul.f32 %v342, %v342
    %v451 = vmul.f32 %v344, %v344
    %v452 = vmul.f32 %v259, %v259
    %v453 = vmul.f32 %v261, %v261
    %v454 = vmul.f32 %v348, %v348
    %v455 = vmul.f32 %v350, %v350
    %v456 = vmul.f32 %v265, %v265
    %v457 = vmul.f32 %v267, %v267
    %v458 = vmul.f32 %v354, %v354
    %v459 = vmul.f32 %v356, %v356
    %v460 = vadd.f32 %v444, %v448
    %v461 = vadd.f32 %v460, %v452
    %v462 = vadd.f32 %v461, %v456
    %v463 = vrot.slane %v462, 4
    %v464 = vadd.f32 %v462, %v463
    %v465 = vrot.slane %v464, 2
    %v466 = vadd.f32 %v464, %v465
    %v467 = vrot.slane %v466, 1
    %v468 = vadd.f32 %v466, %v467
    %v469 = vadd.f32 %v445, %v449
    %v470 = vadd.f32 %v469, %v453
    %v471 = vadd.f32 %v470, %v457
    %v472 = vrot.slane %v471, 4
    %v473 = vadd.f32 %v471, %v472
    %v474 = vrot.slane %v473, 2
    %v475 = vadd.f32 %v473, %v474
    %v476 = vrot.slane %v475, 1
    %v477 = vadd.f32 %v475, %v476
    %v478 = vadd.f32 %v446, %v450
    %v479 = vadd.f32 %v478, %v454
    %v480 = vadd.f32 %v479, %v458
    %v481 = vrot.slane %v480, 4
    %v482 = vadd.f32 %v480, %v481
    %v483 = vrot.slane %v482, 2
    %v484 = vadd.f32 %v482, %v483
    %v485 = vrot.slane %v484, 1
    %v486 = vadd.f32 %v484, %v485
    %v487 = vadd.f32 %v447, %v451
    %v488 = vadd.f32 %v487, %v455
    %v489 = vadd.f32 %v488, %v459
    %v490 = vrot.slane %v489, 4
    %v491 = vadd.f32 %v489, %v490
    %v492 = vrot.slane %v491, 2
    %v493 = vadd.f32 %v491, %v492
    %v494 = vrot.slane %v493, 1
    %v495 = vadd.f32 %v493, %v494
    %v500 = vcombine.low %v468, %v477
    %v501 = vcombine.low %v486, %v495
    %v503 = vunpack.c.l.s4 1966171168
    %v504 = vunpack.c.0.s8 %v503
    %v505 = vlaneseq
    %v506 = vshrl.u32 %v505, 7
    %v507 = vsub.s32 %v504, %v506
    %v508 = vrot.slane %v500, %v507
    %v510 = vunpack.c.l.s4 1966171168
    %v511 = vunpack.c.0.s8 %v510
    %v512 = vlaneseq
    %v513 = vshrl.u32 %v512, 7
    %v514 = vsub.s32 %v511, %v513
    %v515 = vrot.slane %v501, %v514
    %v516 = vcombine.low %v508, %v515
    %v518 = vunpack.c.l.s4 1966171168
    %v519 = vunpack.c.0.s8 %v518
    %v520 = vlaneseq
    %v521 = vshrl.u32 %v520, 7
    %v522 = vsub.s32 %v519, %v521
    %v523 = vrot.slane %v516, %v522
    %525 = vst.msk [vmem:[#allocation10] sm:$0xf] %vm442, %v523
    // Predicated region
    $region18: #{tpu_custom_call.1} parent=1 // pred_check
      _
    $region19: #{tpu_custom_call.1} parent=1 // pred_check_branch
      %527 = sbr.rel (0) target = $region21
    $region20: #{tpu_custom_call.1} parent=1 // pred_region
      %s529 = ssub.s32 2048, 2048
      %530 = vsyncadd [#allocation4], %s529
      %s531 = sshll.u32 [#allocation7], 4
      %s532 = int_to_ptr.vmem [resolvable:$true] %s531
      %537 = dma.vmem_to_hbm [thread:$0]  %s532, 2048, %s2, [#allocation4], 512, 512, 32
    $region21: #{tpu_custom_call.1} parent=1 // pred_fallthru
      _
    // Predicated region
    $region22: #{tpu_custom_call.1} parent=1 // pred_check
      _
    $region23: #{tpu_custom_call.1} parent=1 // pred_check_branch
      %539 = sbr.rel (0) target = $region25
    $region24: #{tpu_custom_call.1} parent=1 // pred_region
      %s541 = ssub.s32 64, 64
      %542 = vsyncadd [#allocation9], %s541
      %s544 = sshll.u32 [#allocation8], 4
      %s545 = int_to_ptr.vmem [resolvable:$true] %s544
      %547 = dma.vmem_to_hbm [thread:$0]  %s545, 64, %s3, [#allocation9]
    $region25: #{tpu_custom_call.1} parent=1 // pred_fallthru
      _
    // Predicated region
    $region26: #{tpu_custom_call.1} parent=1 // pred_check
      _
    $region27: #{tpu_custom_call.1} parent=1 // pred_check_branch
      %549 = sbr.rel (0) target = $region29
    $region28: #{tpu_custom_call.1} parent=1 // pred_region
      %s551 = ssub.s32 64, 64
      %552 = vsyncadd [#allocation9], %s551
      %s554 = sshll.u32 [#allocation10], 4
      %s555 = int_to_ptr.vmem [resolvable:$true] %s554
      %557 = dma.vmem_to_hbm [thread:$0]  %s555, 64, %s4, [#allocation9]
    $region29: #{tpu_custom_call.1} parent=1 // pred_fallthru
      _
    // Predicated region
    $region30: #{tpu_custom_call.1} parent=1 // pred_check
      _
    $region31: #{tpu_custom_call.1} parent=1 // pred_check_branch
      %559 = sbr.rel (0) target = $region33
    $region32: #{tpu_custom_call.1} parent=1 // pred_region
      %560 = dma.done [#allocation4], 2048
    $region33: #{tpu_custom_call.1} parent=1 // pred_fallthru
      _
    // Predicated region
    $region34: #{tpu_custom_call.1} parent=1 // pred_check
      _
    $region35: #{tpu_custom_call.1} parent=1 // pred_check_branch
      %562 = sbr.rel (0) target = $region37
    $region36: #{tpu_custom_call.1} parent=1 // pred_region
      %563 = dma.done [#allocation9], 64
    $region37: #{tpu_custom_call.1} parent=1 // pred_fallthru
      _
    // Predicated region
    $region38: #{tpu_custom_call.1} parent=1 // pred_check
      _
    $region39: #{tpu_custom_call.1} parent=1 // pred_check_branch
      %565 = sbr.rel (0) target = $region41
    $region40: #{tpu_custom_call.1} parent=1 // pred_region
      %566 = dma.done [#allocation9], 64
    $region41: #{tpu_custom_call.1} parent=1 // pred_fallthru
      _
    %567 = vsyncpa [#allocation3], 1
    %568 = vsyncpa [#allocation6], 1
    %569 = vsyncpa [#allocation4], 1
    %570 = vsyncpa [#allocation9], 1

</llo_original>
